<compile_context>
chip_gen: v6e
topology: v6e:2x2x1
jax: 0.10.0
libtpu: 0.0.40
codegen_flags: <defaults>
</compile_context>

<pallas_src>
import jax
import jax.numpy as jnp
import jax.scipy.linalg
from jax.experimental import pallas as pl
from jax.experimental.pallas import tpu as pltpu


def _round_up(n: int, m: int) -> int:
    return ((n + m - 1) // m) * m


def _fused_mlp_kernel(x_ref, w1_ref, b1_ref, w2c_ref, b2_ref, w3_ref, b3_ref,
                      out_ref, w2x_ref):
    """One batch tile: the full ensemble (+ prior) forward = 3 MXU matmuls + 2 ReLUs.

    w2c_ref holds the layer-2 weights compactly as (2E, H, H); the block-diagonal
    (E*2H, E*2H) matrix is materialized in the VMEM scratch `w2x_ref` so its zeros
    only ever live in VMEM, never in HBM/DMA.
    """
    n_branch, hid, _ = w2c_ref.shape          # (2E, H, H) — static

    # Expand compact layer-2 weights into the block-diagonal scratch.
    w2x_ref[...] = jnp.zeros_like(w2x_ref)
    for j in range(n_branch):                  # static, unrolled: 2E tiny block stores
        lo = j * hid
        w2x_ref[lo:lo + hid, lo:lo + hid] = w2c_ref[j]

    x = x_ref[...]                                                         # (bm, F_in)
    h = jnp.dot(x, w1_ref[...], preferred_element_type=jnp.float32) + b1_ref[...]
    h = jnp.maximum(h, 0.0)                                                # f32 (bm, E*2H)
    h = jnp.dot(h.astype(w2x_ref.dtype), w2x_ref[...],
                preferred_element_type=jnp.float32) + b2_ref[...]
    h = jnp.maximum(h, 0.0)                                                # f32 (bm, E*2H)
    out = jnp.dot(h.astype(w3_ref.dtype), w3_ref[...],
                  preferred_element_type=jnp.float32) + b3_ref[...]
    out_ref[...] = out.astype(out_ref.dtype)                               # (bm, E*O)


def pack_ensemble_with_prior_params(params, prior_params, prior_scale,
                                    dtype=jnp.bfloat16):
    """Fuse (net, prior_net) and all E members into block-structured weights.

    Call this ONCE at init (or whenever the weights change) and reuse the result for
    every forward call — per-call packing was the dominant cost of the previous version.

    Lane layout per member e (hidden width H, H2 = 2H):
      layer-1/2 activations: lanes [e*H2, e*H2+H) = main net, [e*H2+H, (e+1)*H2) = prior
      layer-3 output:        lanes [e*O, (e+1)*O)
    prior_scale is folded into W3/b3 in f32 before any cast, so the in-kernel
    `q + s*prior_q` multiply-add disappears (prior is .detach()'d; forward-only here).

    dtype=bfloat16 halves the per-call weight DMA (kernel is DMA-bound) and hits the
    bf16-native MXUs at full rate; dots still accumulate in f32 and biases stay f32.
    Use dtype=float32 for tight parity with the torch reference.
    """
    E, F_in, H = params["w1"].shape
    O = params["w3"].shape[2]
    H2 = 2 * H
    s = jnp.float32(prior_scale)

    # Layer 1: W1' = [w1_e | pw1_e] per member, member-major along the lane axis (dense).
    w1_pair = jnp.concatenate([params["w1"], prior_params["w1"]], axis=-1)      # (E,F,2H)
    W1 = jnp.transpose(w1_pair, (1, 0, 2)).reshape(F_in, E * H2)                # (F, E*2H)
    B1 = jnp.concatenate([params["b1"], prior_params["b1"]], axis=-1).reshape(1, E * H2)

    # Layer 2: stored COMPACTLY as (2E, H, H) in branch order (m0, p0, m1, p1, ...);
    # the kernel expands it into the block-diagonal (E*2H, E*2H) VMEM scratch, so the
    # 1 - 1/(2E) zero fraction is never DMA'd from HBM.
    W2c = jnp.stack([params["w2"], prior_params["w2"]], axis=1).reshape(2 * E, H, H)
    B2 = jnp.concatenate([params["b2"], prior_params["b2"]], axis=-1).reshape(1, E * H2)

    # Layer 3: block-diagonal [w3_e ; s*pw3_e] per member.  Kept expanded — it is only
    # (E*2H, E*O), a few KB, so its zeros aren't worth an in-kernel expansion.
    blocks3 = [jnp.concatenate([params["w3"][e], s * prior_params["w3"][e]], axis=0)
               for e in range(E)]
    W3 = jax.scipy.linalg.block_diag(*blocks3)                                  # (E*2H, E*O)
    B3 = (params["b3"] + s * prior_params["b3"]).reshape(1, E * O)

    # Biases stay f32: post-dot add/ReLU runs on the f32 VPU path (v5e-safe).
    return {
        "W1": W1.astype(dtype), "B1": B1.astype(jnp.float32),
        "W2c": W2c.astype(dtype), "B2": B2.astype(jnp.float32),
        "W3": W3.astype(dtype), "B3": B3.astype(jnp.float32),
    }


def ensemble_with_prior_forward(x, packed):
    """x: (B, R, C).  packed: output of pack_ensemble_with_prior_params (init-time).

    Returns (B, E, output_size) float32.
    """
    W1, B1, W2c, B2, W3, B3 = (packed[k] for k in ("W1", "B1", "W2c", "B2", "W3", "B3"))
    F_in, EH2 = W1.shape
    n_branch, H, _ = W2c.shape
    E = n_branch // 2
    EO = W3.shape[1]
    dtype = W1.dtype

    B = x.shape[0]
    x_flat = x.reshape(B, F_in).astype(dtype)

    # Batch tiling: pad to a sublane multiple; tiles are independent ("parallel") so the
    # runtime can shard them across both TensorCores on v7x at production batch sizes.
    bm = min(128, _round_up(B, 8))
    B_pad = _round_up(B, bm)
    if B_pad != B:
        x_flat = jnp.pad(x_flat, ((0, B_pad - B), (0, 0)))
    grid = (B_pad // bm,)

    # Advisory cost so XLA schedules surrounding ops around the custom call.
    args = (x_flat, W1, B1, W2c, B2, W3, B3)
    bytes_accessed = sum(int(a.size) * a.dtype.itemsize for a in args) + B_pad * EO * 4
    flops = 2 * B_pad * (F_in * EH2 + EH2 * EH2 + EH2 * EO)

    # VMEM note (v7x, 64 MiB): the block-diagonal scratch is (E*2H)^2 * itemsize; keep
    # E*2H <~ 4k (bf16) or switch layer 2 to a per-member grid axis beyond that.
    out = pl.pallas_call(
        _fused_mlp_kernel,
        out_shape=jax.ShapeDtypeStruct((B_pad, EO), jnp.float32),
        grid=grid,
        in_specs=[
            pl.BlockSpec((bm, F_in), lambda i: (i, 0)),            # x: tiled over batch
            pl.BlockSpec((F_in, EH2), lambda i: (0, 0)),           # W1 (dense packed)
            pl.BlockSpec((1, EH2), lambda i: (0, 0)),              # b1 (f32)
            pl.BlockSpec((n_branch, H, H), lambda i: (0, 0, 0)),   # W2 compact (2E,H,H)
            pl.BlockSpec((1, EH2), lambda i: (0, 0)),              # b2 (f32)
            pl.BlockSpec((EH2, EO), lambda i: (0, 0)),             # W3 block-diag (tiny)
            pl.BlockSpec((1, EO), lambda i: (0, 0)),               # b3 (f32, prior folded)
        ],
        out_specs=pl.BlockSpec((bm, EO), lambda i: (i, 0)),
        scratch_shapes=[pltpu.VMEM((EH2, EH2), dtype)],            # block-diag W2 expansion
        compiler_params=pltpu.CompilerParams(dimension_semantics=("parallel",)),
        cost_estimate=pl.CostEstimate(flops=int(flops), transcendentals=0,
                                      bytes_accessed=int(bytes_accessed)),
    )(*args)

    # Output lanes are member-major, so this reshape is free (contiguous, no transpose).
    return out[:B].reshape(B, E, EO // E)


def _init_ensemble_mlp(key, ensemble_size, input_size, hidden_size, output_size):
    """Deterministic PyTorch-Linear-style init: U(-1/sqrt(fan_in), 1/sqrt(fan_in))."""
    dims = [(input_size, hidden_size), (hidden_size, hidden_size), (hidden_size, output_size)]
    params = {}
    for i, (fi, fo) in enumerate(dims, start=1):
        key, kw, kb = jax.random.split(key, 3)
        bound = 1.0 / jnp.sqrt(float(fi))
        params[f"w{i}"] = jax.random.uniform(
            kw, (ensemble_size, fi, fo), jnp.float32, -bound, bound)
        params[f"b{i}"] = jax.random.uniform(
            kb, (ensemble_size, 1, fo), jnp.float32, -bound, bound)
    return params, key


def _ref_forward(x, params, prior_params, prior_scale):
    """Pure-JAX reference mirroring the torch forward (unpacked f32 weights)."""
    B = x.shape[0]
    xf = x.reshape(B, -1).astype(jnp.float32)

    def mlp(p):
        h = jnp.einsum("bi,eio->ebo", xf, p["w1"]) + p["b1"]
        h = jnp.maximum(h, 0.0)
        h = jnp.einsum("ebi,eio->ebo", h, p["w2"]) + p["b2"]
        h = jnp.maximum(h, 0.0)
        return jnp.einsum("ebi,eio->ebo", h, p["w3"]) + p["b3"]

    q = mlp(params)
    prior_q = mlp(prior_params)
    return jnp.swapaxes(q + prior_scale * prior_q, 0, 1)


if __name__ == "__main__":
    # Small DeepSea-like shapes: 8x8 observation grid, 2 actions, ensemble of 4.
    batch, rows, cols = 2, 8, 8
    input_size = rows * cols
    hidden_size = 32
    output_size = 2
    ensemble_size = 4
    prior_scale = 3.0

    key = jax.random.PRNGKey(0)
    key, kx = jax.random.split(key)
    x = jax.random.normal(kx, (batch, rows, cols), jnp.float32)

    params, key = _init_ensemble_mlp(key, ensemble_size, input_size, hidden_size, output_size)
    prior_params, key = _init_ensemble_mlp(key, ensemble_size, input_size, hidden_size, output_size)

    ref = _ref_forward(x, params, prior_params, prior_scale)
    fwd = jax.jit(ensemble_with_prior_forward)

    # TODO(synk): .detach() on the prior is only honored because this is forward-only;
    # differentiating this kernel would need a custom_vjp stopping grads on the prior half.

    # (1) f32-packed path: tight parity with the torch reference.
    packed_f32 = pack_ensemble_with_prior_params(params, prior_params, prior_scale,
                                                 dtype=jnp.float32)
    out_f32 = jax.block_until_ready(fwd(x, packed_f32))
    assert out_f32.shape == (batch, ensemble_size, output_size), out_f32.shape
    assert jnp.allclose(out_f32, ref, atol=1e-4, rtol=1e-4), "f32 path mismatch vs reference"

    # (2) default bf16-packed path (production default: ~half the weight DMA bytes).
    packed_bf16 = pack_ensemble_with_prior_params(params, prior_params, prior_scale)
    out_bf16 = jax.block_until_ready(fwd(x, packed_bf16))
    assert out_bf16.shape == (batch, ensemble_size, output_size), out_bf16.shape
    assert jnp.allclose(out_bf16, ref, atol=5e-2, rtol=5e-2), "bf16 path mismatch vs reference"

    print("KERNEL_OK")
</pallas_src>

<mosaic_0001>
module attributes {stable_mosaic.version = 11 : i64} {
  func.func @_fused_mlp_kernel(%arg0: i32, %arg1: memref<8x64xf32, #tpu.memory_space<vmem>>, %arg2: memref<64x256xf32, #tpu.memory_space<vmem>>, %arg3: memref<1x256xf32, #tpu.memory_space<vmem>>, %arg4: memref<8x32x32xf32, #tpu.memory_space<vmem>>, %arg5: memref<1x256xf32, #tpu.memory_space<vmem>>, %arg6: memref<256x8xf32, #tpu.memory_space<vmem>>, %arg7: memref<1x8xf32, #tpu.memory_space<vmem>>, %arg8: memref<8x8xf32, #tpu.memory_space<vmem>>, %arg9: memref<256x256xf32, #tpu.memory_space<vmem>>) attributes {dimension_semantics = [#tpu.dimension_semantics<parallel>], iteration_bounds = array<i64: 1>, scalar_prefetch = 0 : i64, scratch_operands = 1 : i64, tpu.core_type = #tpu.core_type<tc>, window_params = [{transform_indices = @transform_0, window_bounds = array<i64: 8, 64>}, {pipeline_mode = #tpu.pipeline_mode<synchronous>, transform_indices = @transform_1, window_bounds = array<i64: 64, 256>}, {pipeline_mode = #tpu.pipeline_mode<synchronous>, transform_indices = @transform_2, window_bounds = array<i64: 1, 256>}, {pipeline_mode = #tpu.pipeline_mode<synchronous>, transform_indices = @transform_3, window_bounds = array<i64: 8, 32, 32>}, {pipeline_mode = #tpu.pipeline_mode<synchronous>, transform_indices = @transform_4, window_bounds = array<i64: 1, 256>}, {pipeline_mode = #tpu.pipeline_mode<synchronous>, transform_indices = @transform_5, window_bounds = array<i64: 256, 8>}, {pipeline_mode = #tpu.pipeline_mode<synchronous>, transform_indices = @transform_6, window_bounds = array<i64: 1, 8>}, {transform_indices = @transform_7, window_bounds = array<i64: 8, 8>}]} {
    %cst = arith.constant 0.000000e+00 : f32
    %0 = vector.broadcast %cst : f32 to vector<256x256xf32>
    %c0 = arith.constant 0 : index
    %c0_0 = arith.constant 0 : index
    %1 = vector.load %arg9[%c0, %c0_0] : memref<256x256xf32, #tpu.memory_space<vmem>>, vector<256x256xf32>
    tpu.vector_store %arg9[%c0, %c0_0], %0 {strides = array<i32>} : memref<256x256xf32, #tpu.memory_space<vmem>>, vector<256x256xf32>,
    %c0_1 = arith.constant 0 : index
    %c0_2 = arith.constant 0 : index
    %c0_3 = arith.constant 0 : index
    %2 = vector.load %arg4[%c0_1, %c0_2, %c0_3] : memref<8x32x32xf32, #tpu.memory_space<vmem>>, vector<1x32x32xf32>
    %3 = vector.shape_cast %2 : vector<1x32x32xf32> to vector<32x32xf32>
    %c0_4 = arith.constant 0 : index
    %c0_5 = arith.constant 0 : index
    %4 = vector.load %arg9[%c0_4, %c0_5] : memref<256x256xf32, #tpu.memory_space<vmem>>, vector<32x32xf32>
    tpu.vector_store %arg9[%c0_4, %c0_5], %3 {strides = array<i32>} : memref<256x256xf32, #tpu.memory_space<vmem>>, vector<32x32xf32>,
    %c1 = arith.constant 1 : index
    %c0_6 = arith.constant 0 : index
    %c0_7 = arith.constant 0 : index
    %5 = vector.load %arg4[%c1, %c0_6, %c0_7] : memref<8x32x32xf32, #tpu.memory_space<vmem>>, vector<1x32x32xf32>
    %6 = vector.shape_cast %5 : vector<1x32x32xf32> to vector<32x32xf32>
    %c32 = arith.constant 32 : index
    %c32_8 = arith.constant 32 : index
    %7 = vector.load %arg9[%c32, %c32_8] : memref<256x256xf32, #tpu.memory_space<vmem>>, vector<32x32xf32>
    tpu.vector_store %arg9[%c32, %c32_8], %6 {strides = array<i32>} : memref<256x256xf32, #tpu.memory_space<vmem>>, vector<32x32xf32>,
    %c2 = arith.constant 2 : index
    %c0_9 = arith.constant 0 : index
    %c0_10 = arith.constant 0 : index
    %8 = vector.load %arg4[%c2, %c0_9, %c0_10] : memref<8x32x32xf32, #tpu.memory_space<vmem>>, vector<1x32x32xf32>
    %9 = vector.shape_cast %8 : vector<1x32x32xf32> to vector<32x32xf32>
    %c64 = arith.constant 64 : index
    %c64_11 = arith.constant 64 : index
    %10 = vector.load %arg9[%c64, %c64_11] : memref<256x256xf32, #tpu.memory_space<vmem>>, vector<32x32xf32>
    tpu.vector_store %arg9[%c64, %c64_11], %9 {strides = array<i32>} : memref<256x256xf32, #tpu.memory_space<vmem>>, vector<32x32xf32>,
    %c3 = arith.constant 3 : index
    %c0_12 = arith.constant 0 : index
    %c0_13 = arith.constant 0 : index
    %11 = vector.load %arg4[%c3, %c0_12, %c0_13] : memref<8x32x32xf32, #tpu.memory_space<vmem>>, vector<1x32x32xf32>
    %12 = vector.shape_cast %11 : vector<1x32x32xf32> to vector<32x32xf32>
    %c96 = arith.constant 96 : index
    %c96_14 = arith.constant 96 : index
    %13 = vector.load %arg9[%c96, %c96_14] : memref<256x256xf32, #tpu.memory_space<vmem>>, vector<32x32xf32>
    tpu.vector_store %arg9[%c96, %c96_14], %12 {strides = array<i32>} : memref<256x256xf32, #tpu.memory_space<vmem>>, vector<32x32xf32>,
    %c4 = arith.constant 4 : index
    %c0_15 = arith.constant 0 : index
    %c0_16 = arith.constant 0 : index
    %14 = vector.load %arg4[%c4, %c0_15, %c0_16] : memref<8x32x32xf32, #tpu.memory_space<vmem>>, vector<1x32x32xf32>
    %15 = vector.shape_cast %14 : vector<1x32x32xf32> to vector<32x32xf32>
    %c128 = arith.constant 128 : index
    %c128_17 = arith.constant 128 : index
    %16 = vector.load %arg9[%c128, %c128_17] : memref<256x256xf32, #tpu.memory_space<vmem>>, vector<32x32xf32>
    tpu.vector_store %arg9[%c128, %c128_17], %15 {strides = array<i32>} : memref<256x256xf32, #tpu.memory_space<vmem>>, vector<32x32xf32>,
    %c5 = arith.constant 5 : index
    %c0_18 = arith.constant 0 : index
    %c0_19 = arith.constant 0 : index
    %17 = vector.load %arg4[%c5, %c0_18, %c0_19] : memref<8x32x32xf32, #tpu.memory_space<vmem>>, vector<1x32x32xf32>
    %18 = vector.shape_cast %17 : vector<1x32x32xf32> to vector<32x32xf32>
    %c160 = arith.constant 160 : index
    %c160_20 = arith.constant 160 : index
    %19 = vector.load %arg9[%c160, %c160_20] : memref<256x256xf32, #tpu.memory_space<vmem>>, vector<32x32xf32>
    tpu.vector_store %arg9[%c160, %c160_20], %18 {strides = array<i32>} : memref<256x256xf32, #tpu.memory_space<vmem>>, vector<32x32xf32>,
    %c6 = arith.constant 6 : index
    %c0_21 = arith.constant 0 : index
    %c0_22 = arith.constant 0 : index
    %20 = vector.load %arg4[%c6, %c0_21, %c0_22] : memref<8x32x32xf32, #tpu.memory_space<vmem>>, vector<1x32x32xf32>
    %21 = vector.shape_cast %20 : vector<1x32x32xf32> to vector<32x32xf32>
    %c192 = arith.constant 192 : index
    %c192_23 = arith.constant 192 : index
    %22 = vector.load %arg9[%c192, %c192_23] : memref<256x256xf32, #tpu.memory_space<vmem>>, vector<32x32xf32>
    tpu.vector_store %arg9[%c192, %c192_23], %21 {strides = array<i32>} : memref<256x256xf32, #tpu.memory_space<vmem>>, vector<32x32xf32>,
    %c7 = arith.constant 7 : index
    %c0_24 = arith.constant 0 : index
    %c0_25 = arith.constant 0 : index
    %23 = vector.load %arg4[%c7, %c0_24, %c0_25] : memref<8x32x32xf32, #tpu.memory_space<vmem>>, vector<1x32x32xf32>
    %24 = vector.shape_cast %23 : vector<1x32x32xf32> to vector<32x32xf32>
    %c224 = arith.constant 224 : index
    %c224_26 = arith.constant 224 : index
    %25 = vector.load %arg9[%c224, %c224_26] : memref<256x256xf32, #tpu.memory_space<vmem>>, vector<32x32xf32>
    tpu.vector_store %arg9[%c224, %c224_26], %24 {strides = array<i32>} : memref<256x256xf32, #tpu.memory_space<vmem>>, vector<32x32xf32>,
    %c0_27 = arith.constant 0 : index
    %c0_28 = arith.constant 0 : index
    %26 = vector.load %arg1[%c0_27, %c0_28] : memref<8x64xf32, #tpu.memory_space<vmem>>, vector<8x64xf32>
    %c0_29 = arith.constant 0 : index
    %c0_30 = arith.constant 0 : index
    %27 = vector.load %arg2[%c0_29, %c0_30] : memref<64x256xf32, #tpu.memory_space<vmem>>, vector<64x256xf32>
    %cst_31 = arith.constant dense<0.000000e+00> : vector<8x256xf32>
    %28 = tpu.matmul %26, %27, %cst_31 {dimension_numbers = #tpu.dot_dimension_numbers<[1], [0], [0], [1], [0, 0, 1, 1], [], []>} : vector<8x64xf32>, vector<64x256xf32>, vector<8x256xf32> -> vector<8x256xf32>
    %c0_32 = arith.constant 0 : index
    %c0_33 = arith.constant 0 : index
    %29 = vector.load %arg3[%c0_32, %c0_33] : memref<1x256xf32, #tpu.memory_space<vmem>>, vector<1x256xf32>
    %30 = vector.broadcast %29 : vector<1x256xf32> to vector<8x256xf32>
    %31 = arith.addf %28, %30 : vector<8x256xf32>
    %cst_34 = arith.constant 0.000000e+00 : f32
    %32 = vector.broadcast %cst_34 : f32 to vector<8x256xf32>
    %33 = arith.maximumf %31, %32 : vector<8x256xf32>
    %c0_35 = arith.constant 0 : index
    %c0_36 = arith.constant 0 : index
    %34 = vector.load %arg9[%c0_35, %c0_36] : memref<256x256xf32, #tpu.memory_space<vmem>>, vector<256x256xf32>
    %cst_37 = arith.constant dense<0.000000e+00> : vector<8x256xf32>
    %35 = tpu.matmul %33, %34, %cst_37 {dimension_numbers = #tpu.dot_dimension_numbers<[1], [0], [0], [1], [0, 0, 1, 1], [], []>} : vector<8x256xf32>, vector<256x256xf32>, vector<8x256xf32> -> vector<8x256xf32>
    %c0_38 = arith.constant 0 : index
    %c0_39 = arith.constant 0 : index
    %36 = vector.load %arg5[%c0_38, %c0_39] : memref<1x256xf32, #tpu.memory_space<vmem>>, vector<1x256xf32>
    %37 = vector.broadcast %36 : vector<1x256xf32> to vector<8x256xf32>
    %38 = arith.addf %35, %37 : vector<8x256xf32>
    %cst_40 = arith.constant 0.000000e+00 : f32
    %39 = vector.broadcast %cst_40 : f32 to vector<8x256xf32>
    %40 = arith.maximumf %38, %39 : vector<8x256xf32>
    %c0_41 = arith.constant 0 : index
    %c0_42 = arith.constant 0 : index
    %41 = vector.load %arg6[%c0_41, %c0_42] : memref<256x8xf32, #tpu.memory_space<vmem>>, vector<256x8xf32>
    %cst_43 = arith.constant dense<0.000000e+00> : vector<8x8xf32>
    %42 = tpu.matmul %40, %41, %cst_43 {dimension_numbers = #tpu.dot_dimension_numbers<[1], [0], [0], [1], [0, 0, 1, 1], [], []>} : vector<8x256xf32>, vector<256x8xf32>, vector<8x8xf32> -> vector<8x8xf32>
    %c0_44 = arith.constant 0 : index
    %c0_45 = arith.constant 0 : index
    %43 = vector.load %arg7[%c0_44, %c0_45] : memref<1x8xf32, #tpu.memory_space<vmem>>, vector<1x8xf32>
    %44 = vector.broadcast %43 : vector<1x8xf32> to vector<8x8xf32>
    %45 = arith.addf %42, %44 : vector<8x8xf32>
    %c0_46 = arith.constant 0 : index
    %c0_47 = arith.constant 0 : index
    %46 = vector.load %arg8[%c0_46, %c0_47] : memref<8x8xf32, #tpu.memory_space<vmem>>, vector<8x8xf32>
    tpu.vector_store %arg8[%c0_46, %c0_47], %45 {strides = array<i32>} : memref<8x8xf32, #tpu.memory_space<vmem>>, vector<8x8xf32>,
    return
  }
  func.func @transform_0(%arg0: i32) -> (i32, i32) {
    %c0_i32 = arith.constant 0 : i32
    %c0_i32_0 = arith.constant 0 : i32
    return %arg0, %c0_i32 : i32, i32
  }
  func.func @transform_1(%arg0: i32) -> (i32, i32) {
    %c0_i32 = arith.constant 0 : i32
    %c0_i32_0 = arith.constant 0 : i32
    %c0_i32_1 = arith.constant 0 : i32
    return %c0_i32, %c0_i32_0 : i32, i32
  }
  func.func @transform_2(%arg0: i32) -> (i32, i32) {
    %c0_i32 = arith.constant 0 : i32
    %c0_i32_0 = arith.constant 0 : i32
    %c0_i32_1 = arith.constant 0 : i32
    return %c0_i32, %c0_i32_0 : i32, i32
  }
  func.func @transform_3(%arg0: i32) -> (i32, i32, i32) {
    %c0_i32 = arith.constant 0 : i32
    %c0_i32_0 = arith.constant 0 : i32
    %c0_i32_1 = arith.constant 0 : i32
    %c0_i32_2 = arith.constant 0 : i32
    return %c0_i32, %c0_i32_0, %c0_i32_1 : i32, i32, i32
  }
  func.func @transform_4(%arg0: i32) -> (i32, i32) {
    %c0_i32 = arith.constant 0 : i32
    %c0_i32_0 = arith.constant 0 : i32
    %c0_i32_1 = arith.constant 0 : i32
    return %c0_i32, %c0_i32_0 : i32, i32
  }
  func.func @transform_5(%arg0: i32) -> (i32, i32) {
    %c0_i32 = arith.constant 0 : i32
    %c0_i32_0 = arith.constant 0 : i32
    %c0_i32_1 = arith.constant 0 : i32
    return %c0_i32, %c0_i32_0 : i32, i32
  }
  func.func @transform_6(%arg0: i32) -> (i32, i32) {
    %c0_i32 = arith.constant 0 : i32
    %c0_i32_0 = arith.constant 0 : i32
    %c0_i32_1 = arith.constant 0 : i32
    return %c0_i32, %c0_i32_0 : i32, i32
  }
  func.func @transform_7(%arg0: i32) -> (i32, i32) {
    %c0_i32 = arith.constant 0 : i32
    %c0_i32_0 = arith.constant 0 : i32
    return %arg0, %c0_i32 : i32, i32
  }
}

</mosaic_0001>

<llo_original>
// kernel: ensemble_with_prior_forward.1
$region0: #{ensemble_with_prior_forward.1}
  #allocation0 [shape = 'u32[]', space=smem, size = 0x4, offset = 0x4, fixed_abs, tag = 'smem constant byte address 0x4 - core index']
  #allocation1 [shape = 'u32[144,128]{1,0:T(1,128)}', space=vmem, size = 0x12000, scoped, tag = 'internal scratch']
  #allocation2 [shape = 'f32[256,256]{1,0:T(8,128)}', space=vmem, size = 0x40000, scoped, tag = 'scratch operand']
  %s0 = inlined_call_operand.vmem [shape: f32[8,64], index: 0, kind: input, shape index: {}]
  %s1 = inlined_call_operand.hbm [shape: f32[64,256], index: 1, kind: input, shape index: {}]
  %s2 = inlined_call_operand.vmem [shape: f32[1,256], index: 2, kind: input, shape index: {}]
  %s3 = inlined_call_operand.vmem [shape: f32[8,32,32], index: 3, kind: input, shape index: {}]
  %s4 = inlined_call_operand.vmem [shape: f32[1,256], index: 4, kind: input, shape index: {}]
  %s5 = inlined_call_operand.vmem [shape: f32[256,8], index: 5, kind: input, shape index: {}]
  %s6 = inlined_call_operand.vmem [shape: f32[1,8], index: 6, kind: input, shape index: {}]
  %s7 = inlined_call_operand.vmem [shape: f32[8,8], index: 7, kind: output, shape index: {}]
  %s8 = sld [smem:[#allocation0]]
  $region42: #{ensemble_with_prior_forward.1} parent=0
    _
  %s10 = ssub.s32 1, %s8
  %s11 = scalar_select 0, %s10, %s8
  $region1: #{ensemble_with_prior_forward.1} parent=0
    #allocation3 [shape = 'u8[65536]{0}', space=vmem, size = 0x10000, scoped, tag = 'input window, operand 1, single buffered']
    #allocation4 [shape = 's32[1]{0}', space=sflag, size = 0x4, scoped, tag = 'scoped memory for ensemble_with_prior_forward.1']
    %12 = vsyncpa [#allocation4], 0
    // Predicated region
    $region2: #{ensemble_with_prior_forward.1} parent=1 // pred_check
      _
    $region3: #{ensemble_with_prior_forward.1} parent=1 // pred_check_branch
      %14 = sbr.rel (0) target = $region5
    $region4: #{ensemble_with_prior_forward.1} parent=1 // pred_region
      _
    $region5: #{ensemble_with_prior_forward.1} parent=1 // pred_fallthru
      _
    // Predicated region
    $region6: #{ensemble_with_prior_forward.1} parent=1 // pred_check
      _
    $region7: #{ensemble_with_prior_forward.1} parent=1 // pred_check_branch
      %16 = sbr.rel (0) target = $region9
    $region8: #{ensemble_with_prior_forward.1} parent=1 // pred_region
      %s18 = ssub.s32 2048, 2048
      %19 = vsyncadd [#allocation4], %s18
      %s20 = sshll.u32 [#allocation3], 4
      %s21 = int_to_ptr.vmem [resolvable:$true] %s20
      %26 = dma.hbm_to_vmem [thread:$0]  %s1, 2048, %s21, [#allocation4], 256, 256, 16
    $region9: #{ensemble_with_prior_forward.1} parent=1 // pred_fallthru
      _
    // Predicated region
    $region10: #{ensemble_with_prior_forward.1} parent=1 // pred_check
      _
    $region11: #{ensemble_with_prior_forward.1} parent=1 // pred_check_branch
      %28 = sbr.rel (0) target = $region13
    $region12: #{ensemble_with_prior_forward.1} parent=1 // pred_region
      _
    $region13: #{ensemble_with_prior_forward.1} parent=1 // pred_fallthru
      _
    // Predicated region
    $region14: #{ensemble_with_prior_forward.1} parent=1 // pred_check
      _
    $region15: #{ensemble_with_prior_forward.1} parent=1 // pred_check_branch
      %30 = sbr.rel (0) target = $region17
    $region16: #{ensemble_with_prior_forward.1} parent=1 // pred_region
      _
    $region17: #{ensemble_with_prior_forward.1} parent=1 // pred_fallthru
      _
    // Predicated region
    $region18: #{ensemble_with_prior_forward.1} parent=1 // pred_check
      _
    $region19: #{ensemble_with_prior_forward.1} parent=1 // pred_check_branch
      %32 = sbr.rel (0) target = $region21
    $region20: #{ensemble_with_prior_forward.1} parent=1 // pred_region
      _
    $region21: #{ensemble_with_prior_forward.1} parent=1 // pred_fallthru
      _
    // Predicated region
    $region22: #{ensemble_with_prior_forward.1} parent=1 // pred_check
      _
    $region23: #{ensemble_with_prior_forward.1} parent=1 // pred_check_branch
      %34 = sbr.rel (0) target = $region25
    $region24: #{ensemble_with_prior_forward.1} parent=1 // pred_region
      _
    $region25: #{ensemble_with_prior_forward.1} parent=1 // pred_fallthru
      _
    // Predicated region
    $region26: #{ensemble_with_prior_forward.1} parent=1 // pred_check
      _
    $region27: #{ensemble_with_prior_forward.1} parent=1 // pred_check_branch
      %36 = sbr.rel (0) target = $region29
    $region28: #{ensemble_with_prior_forward.1} parent=1 // pred_region
      _
    $region29: #{ensemble_with_prior_forward.1} parent=1 // pred_fallthru
      _
    // Predicated region
    $region30: #{ensemble_with_prior_forward.1} parent=1 // pred_check
      _
    $region31: #{ensemble_with_prior_forward.1} parent=1 // pred_check_branch
      %38 = sbr.rel (0) target = $region33
    $region32: #{ensemble_with_prior_forward.1} parent=1 // pred_region
      %39 = dma.done [#allocation4], 2048
    $region33: #{ensemble_with_prior_forward.1} parent=1 // pred_fallthru
      _
    %40 = vst [vmem:[#allocation2] sm:$0xff] 0.0
    %41 = vst [vmem:[#allocation2 + $0x8] sm:$0xff] 0.0
    %42 = vst [vmem:[#allocation2 + $0x10] sm:$0xff] 0.0
    %43 = vst [vmem:[#allocation2 + $0x18] sm:$0xff] 0.0
    %44 = vst [vmem:[#allocation2 + $0x20] sm:$0xff] 0.0
    %45 = vst [vmem:[#allocation2 + $0x28] sm:$0xff] 0.0
    %46 = vst [vmem:[#allocation2 + $0x30] sm:$0xff] 0.0
    %47 = vst [vmem:[#allocation2 + $0x38] sm:$0xff] 0.0
    %48 = vst [vmem:[#allocation2 + $0x40] sm:$0xff] 0.0
    %49 = vst [vmem:[#allocation2 + $0x48] sm:$0xff] 0.0
    %50 = vst [vmem:[#allocation2 + $0x50] sm:$0xff] 0.0
    %51 = vst [vmem:[#allocation2 + $0x58] sm:$0xff] 0.0
    %52 = vst [vmem:[#allocation2 + $0x60] sm:$0xff] 0.0
    %53 = vst [vmem:[#allocation2 + $0x68] sm:$0xff] 0.0
    %54 = vst [vmem:[#allocation2 + $0x70] sm:$0xff] 0.0
    %55 = vst [vmem:[#allocation2 + $0x78] sm:$0xff] 0.0
    %56 = vst [vmem:[#allocation2 + $0x80] sm:$0xff] 0.0
    %57 = vst [vmem:[#allocation2 + $0x88] sm:$0xff] 0.0
    %58 = vst [vmem:[#allocation2 + $0x90] sm:$0xff] 0.0
    %59 = vst [vmem:[#allocation2 + $0x98] sm:$0xff] 0.0
    %60 = vst [vmem:[#allocation2 + $0xa0] sm:$0xff] 0.0
    %61 = vst [vmem:[#allocation2 + $0xa8] sm:$0xff] 0.0
    %62 = vst [vmem:[#allocation2 + $0xb0] sm:$0xff] 0.0
    %63 = vst [vmem:[#allocation2 + $0xb8] sm:$0xff] 0.0
    %64 = vst [vmem:[#allocation2 + $0xc0] sm:$0xff] 0.0
    %65 = vst [vmem:[#allocation2 + $0xc8] sm:$0xff] 0.0
    %66 = vst [vmem:[#allocation2 + $0xd0] sm:$0xff] 0.0
    %67 = vst [vmem:[#allocation2 + $0xd8] sm:$0xff] 0.0
    %68 = vst [vmem:[#allocation2 + $0xe0] sm:$0xff] 0.0
    %69 = vst [vmem:[#allocation2 + $0xe8] sm:$0xff] 0.0
    %70 = vst [vmem:[#allocation2 + $0xf0] sm:$0xff] 0.0
    %71 = vst [vmem:[#allocation2 + $0xf8] sm:$0xff] 0.0
    %72 = vst [vmem:[#allocation2 + $0x100] sm:$0xff] 0.0
    %73 = vst [vmem:[#allocation2 + $0x108] sm:$0xff] 0.0
    %74 = vst [vmem:[#allocation2 + $0x110] sm:$0xff] 0.0
    %75 = vst [vmem:[#allocation2 + $0x118] sm:$0xff] 0.0
    %76 = vst [vmem:[#allocation2 + $0x120] sm:$0xff] 0.0
    %77 = vst [vmem:[#allocation2 + $0x128] sm:$0xff] 0.0
    %78 = vst [vmem:[#allocation2 + $0x130] sm:$0xff] 0.0
    %79 = vst [vmem:[#allocation2 + $0x138] sm:$0xff] 0.0
    %80 = vst [vmem:[#allocation2 + $0x140] sm:$0xff] 0.0
    %81 = vst [vmem:[#allocation2 + $0x148] sm:$0xff] 0.0
    %82 = vst [vmem:[#allocation2 + $0x150] sm:$0xff] 0.0
    %83 = vst [vmem:[#allocation2 + $0x158] sm:$0xff] 0.0
    %84 = vst [vmem:[#allocation2 + $0x160] sm:$0xff] 0.0
    %85 = vst [vmem:[#allocation2 + $0x168] sm:$0xff] 0.0
    %86 = vst [vmem:[#allocation2 + $0x170] sm:$0xff] 0.0
    %87 = vst [vmem:[#allocation2 + $0x178] sm:$0xff] 0.0
    %88 = vst [vmem:[#allocation2 + $0x180] sm:$0xff] 0.0
    %89 = vst [vmem:[#allocation2 + $0x188] sm:$0xff] 0.0
    %90 = vst [vmem:[#allocation2 + $0x190] sm:$0xff] 0.0
    %91 = vst [vmem:[#allocation2 + $0x198] sm:$0xff] 0.0
    %92 = vst [vmem:[#allocation2 + $0x1a0] sm:$0xff] 0.0
    %93 = vst [vmem:[#allocation2 + $0x1a8] sm:$0xff] 0.0
    %94 = vst [vmem:[#allocation2 + $0x1b0] sm:$0xff] 0.0
    %95 = vst [vmem:[#allocation2 + $0x1b8] sm:$0xff] 0.0
    %96 = vst [vmem:[#allocation2 + $0x1c0] sm:$0xff] 0.0
    %97 = vst [vmem:[#allocation2 + $0x1c8] sm:$0xff] 0.0
    %98 = vst [vmem:[#allocation2 + $0x1d0] sm:$0xff] 0.0
    %99 = vst [vmem:[#allocation2 + $0x1d8] sm:$0xff] 0.0
    %100 = vst [vmem:[#allocation2 + $0x1e0] sm:$0xff] 0.0
    %101 = vst [vmem:[#allocation2 + $0x1e8] sm:$0xff] 0.0
    %102 = vst [vmem:[#allocation2 + $0x1f0] sm:$0xff] 0.0
    %103 = vst [vmem:[#allocation2 + $0x1f8] sm:$0xff] 0.0
    %v104 = vld [vmem:[%s3] sm:$0xff]
    %v105 = vld [vmem:[%s3 + $0x8] sm:$0xff]
    %v106 = vld [vmem:[%s3 + $0x10] sm:$0xff]
    %v107 = vld [vmem:[%s3 + $0x18] sm:$0xff]
    %vm108 = vcmask 261120
    %109 = vst.msk [vmem:[#allocation2] sm:$0xff] %vm108, %v104
    %110 = vst.msk [vmem:[#allocation2 + $0x10] sm:$0xff] %vm108, %v105
    %111 = vst.msk [vmem:[#allocation2 + $0x20] sm:$0xff] %vm108, %v106
    %112 = vst.msk [vmem:[#allocation2 + $0x30] sm:$0xff] %vm108, %v107
    %s113 = scalar_lea.vmem %s3, 32
    %v114 = vld [vmem:[%s113] sm:$0xff]
    %v115 = vld [vmem:[%s113 + $0x8] sm:$0xff]
    %v116 = vld [vmem:[%s113 + $0x10] sm:$0xff]
    %v117 = vld [vmem:[%s113 + $0x18] sm:$0xff]
    %122 = vrot.lane.b32.xlu0 %v114, 32
    %v123 = vpop.permute.xlu0 %122
    %124 = vrot.lane.b32.xlu0 %v115, 32
    %v125 = vpop.permute.xlu0 %124
    %126 = vrot.lane.b32.xlu0 %v116, 32
    %v127 = vpop.permute.xlu0 %126
    %128 = vrot.lane.b32.xlu0 %v117, 32
    %v129 = vpop.permute.xlu0 %128
    %vm134 = vcmask 523520
    %135 = vst.msk [vmem:[#allocation2 + $0x40] sm:$0xff] %vm134, %v123
    %136 = vst.msk [vmem:[#allocation2 + $0x50] sm:$0xff] %vm134, %v125
    %137 = vst.msk [vmem:[#allocation2 + $0x60] sm:$0xff] %vm134, %v127
    %138 = vst.msk [vmem:[#allocation2 + $0x70] sm:$0xff] %vm134, %v129
    %s139 = scalar_lea.vmem %s3, 64
    %v140 = vld [vmem:[%s139] sm:$0xff]
    %v141 = vld [vmem:[%s139 + $0x8] sm:$0xff]
    %v142 = vld [vmem:[%s139 + $0x10] sm:$0xff]
    %v143 = vld [vmem:[%s139 + $0x18] sm:$0xff]
    %148 = vrot.lane.b32.xlu0 %v140, 64
    %v149 = vpop.permute.xlu0 %148
    %150 = vrot.lane.b32.xlu0 %v141, 64
    %v151 = vpop.permute.xlu0 %150
    %152 = vrot.lane.b32.xlu0 %v142, 64
    %v153 = vpop.permute.xlu0 %152
    %154 = vrot.lane.b32.xlu0 %v143, 64
    %v155 = vpop.permute.xlu0 %154
    %vm160 = vcmask 785920
    %161 = vst.msk [vmem:[#allocation2 + $0x80] sm:$0xff] %vm160, %v149
    %162 = vst.msk [vmem:[#allocation2 + $0x90] sm:$0xff] %vm160, %v151
    %163 = vst.msk [vmem:[#allocation2 + $0xa0] sm:$0xff] %vm160, %v153
    %164 = vst.msk [vmem:[#allocation2 + $0xb0] sm:$0xff] %vm160, %v155
    %s165 = scalar_lea.vmem %s3, 96
    %v166 = vld [vmem:[%s165] sm:$0xff]
    %v167 = vld [vmem:[%s165 + $0x8] sm:$0xff]
    %v168 = vld [vmem:[%s165 + $0x10] sm:$0xff]
    %v169 = vld [vmem:[%s165 + $0x18] sm:$0xff]
    %174 = vrot.lane.b32.xlu0 %v166, 96
    %v175 = vpop.permute.xlu0 %174
    %176 = vrot.lane.b32.xlu0 %v167, 96
    %v177 = vpop.permute.xlu0 %176
    %178 = vrot.lane.b32.xlu0 %v168, 96
    %v179 = vpop.permute.xlu0 %178
    %180 = vrot.lane.b32.xlu0 %v169, 96
    %v181 = vpop.permute.xlu0 %180
    %vm186 = vcmask 1048320
    %187 = vst.msk [vmem:[#allocation2 + $0xc0] sm:$0xff] %vm186, %v175
    %188 = vst.msk [vmem:[#allocation2 + $0xd0] sm:$0xff] %vm186, %v177
    %189 = vst.msk [vmem:[#allocation2 + $0xe0] sm:$0xff] %vm186, %v179
    %190 = vst.msk [vmem:[#allocation2 + $0xf0] sm:$0xff] %vm186, %v181
    %s191 = scalar_lea.vmem %s3, 128
    %v192 = vld [vmem:[%s191] sm:$0xff]
    %v193 = vld [vmem:[%s191 + $0x8] sm:$0xff]
    %v194 = vld [vmem:[%s191 + $0x10] sm:$0xff]
    %v195 = vld [vmem:[%s191 + $0x18] sm:$0xff]
    %196 = vst.msk [vmem:[#allocation2 + $0x108] sm:$0xff] %vm108, %v192
    %197 = vst.msk [vmem:[#allocation2 + $0x118] sm:$0xff] %vm108, %v193
    %198 = vst.msk [vmem:[#allocation2 + $0x128] sm:$0xff] %vm108, %v194
    %199 = vst.msk [vmem:[#allocation2 + $0x138] sm:$0xff] %vm108, %v195
    %s200 = scalar_lea.vmem %s3, 160
    %v201 = vld [vmem:[%s200] sm:$0xff]
    %v202 = vld [vmem:[%s200 + $0x8] sm:$0xff]
    %v203 = vld [vmem:[%s200 + $0x10] sm:$0xff]
    %v204 = vld [vmem:[%s200 + $0x18] sm:$0xff]
    %209 = vrot.lane.b32.xlu0 %v201, 32
    %v210 = vpop.permute.xlu0 %209
    %211 = vrot.lane.b32.xlu0 %v202, 32
    %v212 = vpop.permute.xlu0 %211
    %213 = vrot.lane.b32.xlu0 %v203, 32
    %v214 = vpop.permute.xlu0 %213
    %215 = vrot.lane.b32.xlu0 %v204, 32
    %v216 = vpop.permute.xlu0 %215
    %221 = vst.msk [vmem:[#allocation2 + $0x148] sm:$0xff] %vm134, %v210
    %222 = vst.msk [vmem:[#allocation2 + $0x158] sm:$0xff] %vm134, %v212
    %223 = vst.msk [vmem:[#allocation2 + $0x168] sm:$0xff] %vm134, %v214
    %224 = vst.msk [vmem:[#allocation2 + $0x178] sm:$0xff] %vm134, %v216
    %s225 = scalar_lea.vmem %s3, 192
    %v226 = vld [vmem:[%s225] sm:$0xff]
    %v227 = vld [vmem:[%s225 + $0x8] sm:$0xff]
    %v228 = vld [vmem:[%s225 + $0x10] sm:$0xff]
    %v229 = vld [vmem:[%s225 + $0x18] sm:$0xff]
    %234 = vrot.lane.b32.xlu0 %v226, 64
    %v235 = vpop.permute.xlu0 %234
    %236 = vrot.lane.b32.xlu0 %v227, 64
    %v237 = vpop.permute.xlu0 %236
    %238 = vrot.lane.b32.xlu0 %v228, 64
    %v239 = vpop.permute.xlu0 %238
    %240 = vrot.lane.b32.xlu0 %v229, 64
    %v241 = vpop.permute.xlu0 %240
    %246 = vst.msk [vmem:[#allocation2 + $0x188] sm:$0xff] %vm160, %v235
    %247 = vst.msk [vmem:[#allocation2 + $0x198] sm:$0xff] %vm160, %v237
    %248 = vst.msk [vmem:[#allocation2 + $0x1a8] sm:$0xff] %vm160, %v239
    %249 = vst.msk [vmem:[#allocation2 + $0x1b8] sm:$0xff] %vm160, %v241
    %s250 = scalar_lea.vmem %s3, 224
    %v251 = vld [vmem:[%s250] sm:$0xff]
    %v252 = vld [vmem:[%s250 + $0x8] sm:$0xff]
    %v253 = vld [vmem:[%s250 + $0x10] sm:$0xff]
    %v254 = vld [vmem:[%s250 + $0x18] sm:$0xff]
    %259 = vrot.lane.b32.xlu0 %v251, 96
    %v260 = vpop.permute.xlu0 %259
    %261 = vrot.lane.b32.xlu0 %v252, 96
    %v262 = vpop.permute.xlu0 %261
    %263 = vrot.lane.b32.xlu0 %v253, 96
    %v264 = vpop.permute.xlu0 %263
    %265 = vrot.lane.b32.xlu0 %v254, 96
    %v266 = vpop.permute.xlu0 %265
    %271 = vst.msk [vmem:[#allocation2 + $0x1c8] sm:$0xff] %vm186, %v260
    %272 = vst.msk [vmem:[#allocation2 + $0x1d8] sm:$0xff] %vm186, %v262
    %273 = vst.msk [vmem:[#allocation2 + $0x1e8] sm:$0xff] %vm186, %v264
    %274 = vst.msk [vmem:[#allocation2 + $0x1f8] sm:$0xff] %vm186, %v266
    %v275 = vld [vmem:[%s0] sm:$0xff]
    %v276 = vld [vmem:[#allocation3] sm:$0xff]
    %v277 = vld [vmem:[#allocation3 + $0x8] sm:$0xff]
    %v278 = vld [vmem:[#allocation3 + $0x10] sm:$0xff]
    %v279 = vld [vmem:[#allocation3 + $0x18] sm:$0xff]
    %v280 = vld [vmem:[#allocation3 + $0x20] sm:$0xff]
    %v281 = vld [vmem:[#allocation3 + $0x28] sm:$0xff]
    %v282 = vld [vmem:[#allocation3 + $0x30] sm:$0xff]
    %v283 = vld [vmem:[#allocation3 + $0x38] sm:$0xff]
    %v284 = vld [vmem:[#allocation3 + $0x40] sm:$0xff]
    %v285 = vld [vmem:[#allocation3 + $0x48] sm:$0xff]
    %v286 = vld [vmem:[#allocation3 + $0x50] sm:$0xff]
    %v287 = vld [vmem:[#allocation3 + $0x58] sm:$0xff]
    %v288 = vld [vmem:[#allocation3 + $0x60] sm:$0xff]
    %v289 = vld [vmem:[#allocation3 + $0x68] sm:$0xff]
    %v290 = vld [vmem:[#allocation3 + $0x70] sm:$0xff]
    %v291 = vld [vmem:[#allocation3 + $0x78] sm:$0xff]
    %v292 = vld [vmem:[%s2] sm:$0x3]
    %v294 = vlaneseq
    %v295 = vshrl.u32 %v294, 7
    %v296 = vsub.s32 0, %v295
    %v297 = vrot.slane %v292, %v296
    %v298 = vlaneseq
    %v299 = vshrl.u32 %v298, 7
    %v300 = vsub.s32 1, %v299
    %v301 = vrot.slane %v292, %v300
    %vm304 = vcmask 523264
    %v306 = vsel %vm304, %v275, 0
    %308 = vmatprep.subr.mxu0 0.0
    %309 = vmatpush1.msra.mxu0 0.0
    %310 = vmatprep.subr.mxu0 0.0
    %311 = vmatpush1.msra.mxu0 0.0
    %312 = vmatprep.subr.mxu0 0.0
    %313 = vmatpush1.msra.mxu0 0.0
    %314 = vmatprep.subr.mxu0 0.0
    %315 = vmatpush1.msra.mxu0 0.0
    %316 = vmatprep.subr.mxu0 0.0
    %317 = vmatpush1.msra.mxu0 0.0
    %318 = vmatprep.subr.mxu0 0.0
    %319 = vmatpush1.msra.mxu0 0.0
    %320 = vmatprep.subr.mxu0 0.0
    %321 = vmatpush1.msra.mxu0 0.0
    %322 = vmatprep.subr.mxu0 0.0
    %323 = vmatpush1.msra.mxu0 0.0
    %324 = vmatprep.subr.mxu0 %v291
    %325 = vmatpush1.msra.mxu0 %v290
    %326 = vmatprep.subr.mxu0 %v289
    %327 = vmatpush1.msra.mxu0 %v288
    %328 = vmatprep.subr.mxu0 %v287
    %329 = vmatpush1.msra.mxu0 %v286
    %330 = vmatprep.subr.mxu0 %v285
    %331 = vmatpush1.msra.mxu0 %v284
    %332 = vmatprep.subr.mxu0 %v283
    %333 = vmatpush1.msra.mxu0 %v282
    %334 = vmatprep.subr.mxu0 %v281
    %335 = vmatpush1.msra.mxu0 %v280
    %336 = vmatprep.subr.mxu0 %v279
    %337 = vmatpush1.msra.mxu0 %v278
    %338 = vmatprep.subr.mxu0 %v277
    %339 = vmatpush1.msra.mxu0 %v276
    %340 = vmatprep.subr.mxu0 0.0
    %341 = vmatpush2.msra.mxu0 0.0
    %342 = vmatprep.subr.mxu0 0.0
    %343 = vmatpush2.msra.mxu0 0.0
    %344 = vmatprep.subr.mxu0 0.0
    %345 = vmatpush2.msra.mxu0 0.0
    %346 = vmatprep.subr.mxu0 0.0
    %347 = vmatpush2.msra.mxu0 0.0
    %348 = vmatprep.subr.mxu0 0.0
    %349 = vmatpush2.msra.mxu0 0.0
    %350 = vmatprep.subr.mxu0 0.0
    %351 = vmatpush2.msra.mxu0 0.0
    %352 = vmatprep.subr.mxu0 0.0
    %353 = vmatpush2.msra.mxu0 0.0
    %354 = vmatprep.subr.mxu0 0.0
    %355 = vmatpush2.msra.mxu0 0.0
    %356 = vmatprep.subr.mxu0 0.0
    %357 = vmatpush2.msra.mxu0 0.0
    %358 = vmatprep.subr.mxu0 0.0
    %359 = vmatpush2.msra.mxu0 0.0
    %360 = vmatprep.subr.mxu0 0.0
    %361 = vmatpush2.msra.mxu0 0.0
    %362 = vmatprep.subr.mxu0 0.0
    %363 = vmatpush2.msra.mxu0 0.0
    %364 = vmatprep.subr.mxu0 0.0
    %365 = vmatpush2.msra.mxu0 0.0
    %366 = vmatprep.subr.mxu0 0.0
    %367 = vmatpush2.msra.mxu0 0.0
    %368 = vmatprep.subr.mxu0 0.0
    %369 = vmatpush2.msra.mxu0 0.0
    %370 = vmatprep.subr.mxu0 0.0
    %371 = vmatpush2.msra.mxu0 0.0
    %372 = vmatprep.mubr.f32.mxu0 0.0
    %373 = vmatmul.mubr.f32.gmra.mxu0 %v306
    %v374 = vpop.f32.mrf.mxu0
    %v375 = vadd.f32 %v297, %v374
    %v376 = vpop.f32.mrf.mxu0
    %v377 = vadd.f32 %v301, %v376
    %378 = vdwg.mxu0
    %v379 = vmax.f32 %v375, 0.0
    %v380 = vmax.f32 %v377, 0.0
    %v381 = vld [vmem:[#allocation2] sm:$0xff]
    %v382 = vld [vmem:[#allocation2 + $0x8] sm:$0xff]
    %v383 = vld [vmem:[#allocation2 + $0x10] sm:$0xff]
    %v384 = vld [vmem:[#allocation2 + $0x18] sm:$0xff]
    %v385 = vld [vmem:[#allocation2 + $0x20] sm:$0xff]
    %v386 = vld [vmem:[#allocation2 + $0x28] sm:$0xff]
    %v387 = vld [vmem:[#allocation2 + $0x30] sm:$0xff]
    %v388 = vld [vmem:[#allocation2 + $0x38] sm:$0xff]
    %v389 = vld [vmem:[#allocation2 + $0x40] sm:$0xff]
    %v390 = vld [vmem:[#allocation2 + $0x48] sm:$0xff]
    %v391 = vld [vmem:[#allocation2 + $0x50] sm:$0xff]
    %v392 = vld [vmem:[#allocation2 + $0x58] sm:$0xff]
    %v393 = vld [vmem:[#allocation2 + $0x60] sm:$0xff]
    %v394 = vld [vmem:[#allocation2 + $0x68] sm:$0xff]
    %v395 = vld [vmem:[#allocation2 + $0x70] sm:$0xff]
    %v396 = vld [vmem:[#allocation2 + $0x78] sm:$0xff]
    %v397 = vld [vmem:[#allocation2 + $0x80] sm:$0xff]
    %v398 = vld [vmem:[#allocation2 + $0x88] sm:$0xff]
    %v399 = vld [vmem:[#allocation2 + $0x90] sm:$0xff]
    %v400 = vld [vmem:[#allocation2 + $0x98] sm:$0xff]
    %v401 = vld [vmem:[#allocation2 + $0xa0] sm:$0xff]
    %v402 = vld [vmem:[#allocation2 + $0xa8] sm:$0xff]
    %v403 = vld [vmem:[#allocation2 + $0xb0] sm:$0xff]
    %v404 = vld [vmem:[#allocation2 + $0xb8] sm:$0xff]
    %v405 = vld [vmem:[#allocation2 + $0xc0] sm:$0xff]
    %v406 = vld [vmem:[#allocation2 + $0xc8] sm:$0xff]
    %v407 = vld [vmem:[#allocation2 + $0xd0] sm:$0xff]
    %v408 = vld [vmem:[#allocation2 + $0xd8] sm:$0xff]
    %v409 = vld [vmem:[#allocation2 + $0xe0] sm:$0xff]
    %v410 = vld [vmem:[#allocation2 + $0xe8] sm:$0xff]
    %v411 = vld [vmem:[#allocation2 + $0xf0] sm:$0xff]
    %v412 = vld [vmem:[#allocation2 + $0xf8] sm:$0xff]
    %v413 = vld [vmem:[#allocation2 + $0x100] sm:$0xff]
    %v414 = vld [vmem:[#allocation2 + $0x108] sm:$0xff]
    %v415 = vld [vmem:[#allocation2 + $0x110] sm:$0xff]
    %v416 = vld [vmem:[#allocation2 + $0x118] sm:$0xff]
    %v417 = vld [vmem:[#allocation2 + $0x120] sm:$0xff]
    %v418 = vld [vmem:[#allocation2 + $0x128] sm:$0xff]
    %v419 = vld [vmem:[#allocation2 + $0x130] sm:$0xff]
    %v420 = vld [vmem:[#allocation2 + $0x138] sm:$0xff]
    %v421 = vld [vmem:[#allocation2 + $0x140] sm:$0xff]
    %v422 = vld [vmem:[#allocation2 + $0x148] sm:$0xff]
    %v423 = vld [vmem:[#allocation2 + $0x150] sm:$0xff]
    %v424 = vld [vmem:[#allocation2 + $0x158] sm:$0xff]
    %v425 = vld [vmem:[#allocation2 + $0x160] sm:$0xff]
    %v426 = vld [vmem:[#allocation2 + $0x168] sm:$0xff]
    %v427 = vld [vmem:[#allocation2 + $0x170] sm:$0xff]
    %v428 = vld [vmem:[#allocation2 + $0x178] sm:$0xff]
    %v429 = vld [vmem:[#allocation2 + $0x180] sm:$0xff]
    %v430 = vld [vmem:[#allocation2 + $0x188] sm:$0xff]
    %v431 = vld [vmem:[#allocation2 + $0x190] sm:$0xff]
    %v432 = vld [vmem:[#allocation2 + $0x198] sm:$0xff]
    %v433 = vld [vmem:[#allocation2 + $0x1a0] sm:$0xff]
    %v434 = vld [vmem:[#allocation2 + $0x1a8] sm:$0xff]
    %v435 = vld [vmem:[#allocation2 + $0x1b0] sm:$0xff]
    %v436 = vld [vmem:[#allocation2 + $0x1b8] sm:$0xff]
    %v437 = vld [vmem:[#allocation2 + $0x1c0] sm:$0xff]
    %v438 = vld [vmem:[#allocation2 + $0x1c8] sm:$0xff]
    %v439 = vld [vmem:[#allocation2 + $0x1d0] sm:$0xff]
    %v440 = vld [vmem:[#allocation2 + $0x1d8] sm:$0xff]
    %v441 = vld [vmem:[#allocation2 + $0x1e0] sm:$0xff]
    %v442 = vld [vmem:[#allocation2 + $0x1e8] sm:$0xff]
    %v443 = vld [vmem:[#allocation2 + $0x1f0] sm:$0xff]
    %v444 = vld [vmem:[#allocation2 + $0x1f8] sm:$0xff]
    %v445 = vld [vmem:[%s4] sm:$0x3]
    %v447 = vlaneseq
    %v448 = vshrl.u32 %v447, 7
    %v449 = vsub.s32 0, %v448
    %v450 = vrot.slane %v445, %v449
    %v451 = vlaneseq
    %v452 = vshrl.u32 %v451, 7
    %v453 = vsub.s32 1, %v452
    %v454 = vrot.slane %v445, %v453
    %457 = vmatprep.subr.mxu0 %v412
    %458 = vmatpush1.msra.mxu0 %v411
    %459 = vmatprep.subr.mxu0 %v410
    %460 = vmatpush1.msra.mxu0 %v409
    %461 = vmatprep.subr.mxu0 %v408
    %462 = vmatpush1.msra.mxu0 %v407
    %463 = vmatprep.subr.mxu0 %v406
    %464 = vmatpush1.msra.mxu0 %v405
    %465 = vmatprep.subr.mxu0 %v404
    %466 = vmatpush1.msra.mxu0 %v403
    %467 = vmatprep.subr.mxu0 %v402
    %468 = vmatpush1.msra.mxu0 %v401
    %469 = vmatprep.subr.mxu0 %v400
    %470 = vmatpush1.msra.mxu0 %v399
    %471 = vmatprep.subr.mxu0 %v398
    %472 = vmatpush1.msra.mxu0 %v397
    %473 = vmatprep.subr.mxu0 %v396
    %474 = vmatpush1.msra.mxu0 %v395
    %475 = vmatprep.subr.mxu0 %v394
    %476 = vmatpush1.msra.mxu0 %v393
    %477 = vmatprep.subr.mxu0 %v392
    %478 = vmatpush1.msra.mxu0 %v391
    %479 = vmatprep.subr.mxu0 %v390
    %480 = vmatpush1.msra.mxu0 %v389
    %481 = vmatprep.subr.mxu0 %v388
    %482 = vmatpush1.msra.mxu0 %v387
    %483 = vmatprep.subr.mxu0 %v386
    %484 = vmatpush1.msra.mxu0 %v385
    %485 = vmatprep.subr.mxu0 %v384
    %486 = vmatpush1.msra.mxu0 %v383
    %487 = vmatprep.subr.mxu0 %v382
    %488 = vmatpush1.msra.mxu0 %v381
    %489 = vmatprep.subr.mxu0 %v444
    %490 = vmatpush2.msra.mxu0 %v443
    %491 = vmatprep.subr.mxu0 %v442
    %492 = vmatpush2.msra.mxu0 %v441
    %493 = vmatprep.subr.mxu0 %v440
    %494 = vmatpush2.msra.mxu0 %v439
    %495 = vmatprep.subr.mxu0 %v438
    %496 = vmatpush2.msra.mxu0 %v437
    %497 = vmatprep.subr.mxu0 %v436
    %498 = vmatpush2.msra.mxu0 %v435
    %499 = vmatprep.subr.mxu0 %v434
    %500 = vmatpush2.msra.mxu0 %v433
    %501 = vmatprep.subr.mxu0 %v432
    %502 = vmatpush2.msra.mxu0 %v431
    %503 = vmatprep.subr.mxu0 %v430
    %504 = vmatpush2.msra.mxu0 %v429
    %505 = vmatprep.subr.mxu0 %v428
    %506 = vmatpush2.msra.mxu0 %v427
    %507 = vmatprep.subr.mxu0 %v426
    %508 = vmatpush2.msra.mxu0 %v425
    %509 = vmatprep.subr.mxu0 %v424
    %510 = vmatpush2.msra.mxu0 %v423
    %511 = vmatprep.subr.mxu0 %v422
    %512 = vmatpush2.msra.mxu0 %v421
    %513 = vmatprep.subr.mxu0 %v420
    %514 = vmatpush2.msra.mxu0 %v419
    %515 = vmatprep.subr.mxu0 %v418
    %516 = vmatpush2.msra.mxu0 %v417
    %517 = vmatprep.subr.mxu0 %v416
    %518 = vmatpush2.msra.mxu0 %v415
    %519 = vmatprep.subr.mxu0 %v414
    %520 = vmatpush2.msra.mxu0 %v413
    %521 = vmatprep.mubr.f32.mxu0 %v380
    %522 = vmatmul.mubr.f32.gmra.mxu0 %v379
    %v523 = vpop.f32.mrf.mxu0
    %v524 = vadd.f32 %v450, %v523
    %v525 = vpop.f32.mrf.mxu0
    %v526 = vadd.f32 %v454, %v525
    %527 = vdwg.mxu0
    %v528 = vmax.f32 %v524, 0.0
    %v529 = vmax.f32 %v526, 0.0
    %v530 = vld [vmem:[%s5] sm:$0xff]
    %v531 = vld [vmem:[%s5 + $0x8] sm:$0xff]
    %v532 = vld [vmem:[%s5 + $0x10] sm:$0xff]
    %v533 = vld [vmem:[%s5 + $0x18] sm:$0xff]
    %v534 = vld [vmem:[%s5 + $0x20] sm:$0xff]
    %v535 = vld [vmem:[%s5 + $0x28] sm:$0xff]
    %v536 = vld [vmem:[%s5 + $0x30] sm:$0xff]
    %v537 = vld [vmem:[%s5 + $0x38] sm:$0xff]
    %v538 = vld [vmem:[%s5 + $0x40] sm:$0xff]
    %v539 = vld [vmem:[%s5 + $0x48] sm:$0xff]
    %v540 = vld [vmem:[%s5 + $0x50] sm:$0xff]
    %v541 = vld [vmem:[%s5 + $0x58] sm:$0xff]
    %v542 = vld [vmem:[%s5 + $0x60] sm:$0xff]
    %v543 = vld [vmem:[%s5 + $0x68] sm:$0xff]
    %v544 = vld [vmem:[%s5 + $0x70] sm:$0xff]
    %v545 = vld [vmem:[%s5 + $0x78] sm:$0xff]
    %v546 = vld [vmem:[%s5 + $0x80] sm:$0xff]
    %v547 = vld [vmem:[%s5 + $0x88] sm:$0xff]
    %v548 = vld [vmem:[%s5 + $0x90] sm:$0xff]
    %v549 = vld [vmem:[%s5 + $0x98] sm:$0xff]
    %v550 = vld [vmem:[%s5 + $0xa0] sm:$0xff]
    %v551 = vld [vmem:[%s5 + $0xa8] sm:$0xff]
    %v552 = vld [vmem:[%s5 + $0xb0] sm:$0xff]
    %v553 = vld [vmem:[%s5 + $0xb8] sm:$0xff]
    %v554 = vld [vmem:[%s5 + $0xc0] sm:$0xff]
    %v555 = vld [vmem:[%s5 + $0xc8] sm:$0xff]
    %v556 = vld [vmem:[%s5 + $0xd0] sm:$0xff]
    %v557 = vld [vmem:[%s5 + $0xd8] sm:$0xff]
    %v558 = vld [vmem:[%s5 + $0xe0] sm:$0xff]
    %v559 = vld [vmem:[%s5 + $0xe8] sm:$0xff]
    %v560 = vld [vmem:[%s5 + $0xf0] sm:$0xff]
    %v561 = vld [vmem:[%s5 + $0xf8] sm:$0xff]
    %v562 = vld [vmem:[%s6] sm:$0x1]
    %v564 = vlaneseq
    %v565 = vshrl.u32 %v564, 7
    %v566 = vsub.s32 0, %v565
    %v567 = vrot.slane %v562, %v566
    %569 = vmatprep.subr.mxu0 0.0
    %570 = vmatpush1.msra.mxu0 %v545
    %571 = vmatprep.subr.mxu0 0.0
    %572 = vmatpush1.msra.mxu0 %v544
    %573 = vmatprep.subr.mxu0 0.0
    %574 = vmatpush1.msra.mxu0 %v543
    %575 = vmatprep.subr.mxu0 0.0
    %576 = vmatpush1.msra.mxu0 %v542
    %577 = vmatprep.subr.mxu0 0.0
    %578 = vmatpush1.msra.mxu0 %v541
    %579 = vmatprep.subr.mxu0 0.0
    %580 = vmatpush1.msra.mxu0 %v540
    %581 = vmatprep.subr.mxu0 0.0
    %582 = vmatpush1.msra.mxu0 %v539
    %583 = vmatprep.subr.mxu0 0.0
    %584 = vmatpush1.msra.mxu0 %v538
    %585 = vmatprep.subr.mxu0 0.0
    %586 = vmatpush1.msra.mxu0 %v537
    %587 = vmatprep.subr.mxu0 0.0
    %588 = vmatpush1.msra.mxu0 %v536
    %589 = vmatprep.subr.mxu0 0.0
    %590 = vmatpush1.msra.mxu0 %v535
    %591 = vmatprep.subr.mxu0 0.0
    %592 = vmatpush1.msra.mxu0 %v534
    %593 = vmatprep.subr.mxu0 0.0
    %594 = vmatpush1.msra.mxu0 %v533
    %595 = vmatprep.subr.mxu0 0.0
    %596 = vmatpush1.msra.mxu0 %v532
    %597 = vmatprep.subr.mxu0 0.0
    %598 = vmatpush1.msra.mxu0 %v531
    %599 = vmatprep.subr.mxu0 0.0
    %600 = vmatpush1.msra.mxu0 %v530
    %601 = vmatprep.subr.mxu0 0.0
    %602 = vmatpush2.msra.mxu0 %v561
    %603 = vmatprep.subr.mxu0 0.0
    %604 = vmatpush2.msra.mxu0 %v560
    %605 = vmatprep.subr.mxu0 0.0
    %606 = vmatpush2.msra.mxu0 %v559
    %607 = vmatprep.subr.mxu0 0.0
    %608 = vmatpush2.msra.mxu0 %v558
    %609 = vmatprep.subr.mxu0 0.0
    %610 = vmatpush2.msra.mxu0 %v557
    %611 = vmatprep.subr.mxu0 0.0
    %612 = vmatpush2.msra.mxu0 %v556
    %613 = vmatprep.subr.mxu0 0.0
    %614 = vmatpush2.msra.mxu0 %v555
    %615 = vmatprep.subr.mxu0 0.0
    %616 = vmatpush2.msra.mxu0 %v554
    %617 = vmatprep.subr.mxu0 0.0
    %618 = vmatpush2.msra.mxu0 %v553
    %619 = vmatprep.subr.mxu0 0.0
    %620 = vmatpush2.msra.mxu0 %v552
    %621 = vmatprep.subr.mxu0 0.0
    %622 = vmatpush2.msra.mxu0 %v551
    %623 = vmatprep.subr.mxu0 0.0
    %624 = vmatpush2.msra.mxu0 %v550
    %625 = vmatprep.subr.mxu0 0.0
    %626 = vmatpush2.msra.mxu0 %v549
    %627 = vmatprep.subr.mxu0 0.0
    %628 = vmatpush2.msra.mxu0 %v548
    %629 = vmatprep.subr.mxu0 0.0
    %630 = vmatpush2.msra.mxu0 %v547
    %631 = vmatprep.subr.mxu0 0.0
    %632 = vmatpush2.msra.mxu0 %v546
    %633 = vmatprep.mubr.f32.mxu0 %v529
    %634 = vmatmul.mubr.f32.gmra.mxu0 %v528
    %v635 = vpop.f32.mrf.mxu0
    %v636 = vadd.f32 %v567, %v635
    %v637 = vpop.f32.mrf.mxu0
    %638 = vdwg.mxu0
    %vm639 = vcmask 64512
    %640 = vst.msk [vmem:[%s7] sm:$0xff] %vm639, %v636
    // Predicated region
    $region34: #{ensemble_with_prior_forward.1} parent=1 // pred_check
      _
    $region35: #{ensemble_with_prior_forward.1} parent=1 // pred_check_branch
      %642 = sbr.rel (0) target = $region37
    $region36: #{ensemble_with_prior_forward.1} parent=1 // pred_region
      _
    $region37: #{ensemble_with_prior_forward.1} parent=1 // pred_fallthru
      _
    // Predicated region
    $region38: #{ensemble_with_prior_forward.1} parent=1 // pred_check
      _
    $region39: #{ensemble_with_prior_forward.1} parent=1 // pred_check_branch
      %644 = sbr.rel (0) target = $region41
    $region40: #{ensemble_with_prior_forward.1} parent=1 // pred_region
      _
    $region41: #{ensemble_with_prior_forward.1} parent=1 // pred_fallthru
      _
    %645 = vsyncpa [#allocation4], 1

</llo_original>
